<compile_context>
chip_gen: v5e
topology: v5e:2x2
jax: 0.10.0
libtpu: 0.0.40
codegen_flags: <defaults>
</compile_context>

<pallas_src>
import numpy as np
import jax
import jax.numpy as jnp
from jax import lax
from jax.experimental import pallas as pl
from jax.experimental.pallas import tpu as pltpu


def _round_up(x, m):
    return ((x + m - 1) // m) * m


def _make_kernel(P_pad, K_pad, RL):
    """Per-(batch, stack) loss kernel. All shapes static, fully vectorized."""

    def kernel(dets_ref, heat_ref, vals_ref, vis_ref, out_ref):
        # ---- detection (heatmap) loss: sum((pred - gt)^2) over the whole map ----
        d = dets_ref[0, 0]                      # (RL, 128) f32, zero-padded
        g = heat_ref[0]                         # (RL, 128) f32, zero-padded
        diff = d - g
        det_val = jnp.sum(diff * diff)

        # ---- associative-embedding push/pull loss (tag_dim == 1) ----
        vals = vals_ref[0, 0]                   # (P_pad, K_pad) gathered tag values
        vis = vis_ref[0]                        # (P_pad, K_pad) 1.0 where kp visible

        cnt = jnp.sum(vis, axis=1, keepdims=True)                 # (P,1) valid kpts/person
        has = (cnt > 0.0).astype(jnp.float32)                     # (P,1) person valid?
        safe_cnt = jnp.maximum(cnt, 1.0)
        mean = (jnp.sum(vis * vals, axis=1, keepdims=True) / safe_cnt) * has   # (P,1)
        sq = jnp.sum(vis * (vals - mean) ** 2, axis=1, keepdims=True)          # (P,1)
        pull_per = has * sq / safe_cnt                                          # (P,1)
        C = jnp.sum(has)                                           # number of valid people
        pull = jnp.sum(pull_per) / jnp.maximum(C, 1.0)

        # push loss over pairs p1 < p2 < C (slot-indexed, matching the reference)
        row = lax.broadcasted_iota(jnp.int32, (P_pad, P_pad), 0)   # p1
        col = lax.broadcasted_iota(jnp.int32, (P_pad, P_pad), 1)   # p2
        # transpose-free row-vector of means: diag-select then sublane reduce
        mean_row = jnp.sum(jnp.where(row == col, mean, 0.0), axis=0, keepdims=True)  # (1,P)
        dm = mean - mean_row                                       # dm[i,j] = m_i - m_j
        pair = jnp.logical_and(row < col,
                               col.astype(jnp.float32) < C).astype(jnp.float32)
        push_sum = jnp.sum(pair * jnp.exp(-(dm * dm)))             # single vectorized exp
        npairs = C * (C - 1.0) * 0.5
        push = jnp.where(C > 1.0, push_sum / jnp.maximum(npairs, 1.0), push_sum) * 0.5

        # ---- single lane-dense output: lane0=push, lane1=pull, lane2=det ----
        lane = lax.broadcasted_iota(jnp.int32, (1, 128), 1)
        outvec = jnp.where(lane == 0, push,
                 jnp.where(lane == 1, pull,
                 jnp.where(lane == 2, det_val, 0.0)))
        out_ref[0, 0] = outvec.astype(out_ref.dtype)

    return kernel


def calc_loss_forward(preds, keypoints, heatmaps, *, nstack, max_num_light):
    """JAX/Pallas equivalent of calc_loss.forward. Returns (push, pull, det) each [B, nstack]."""
    B = preds.shape[0]
    M = max_num_light
    H, W = preds.shape[-2], preds.shape[-1]
    L = M * H * W
    P, K = keypoints.shape[1], keypoints.shape[2]

    preds = preds.astype(jnp.float32)
    dets = preds[:, :, :M].reshape(B, nstack, L)
    tags = preds[:, :, M:2 * M].reshape(B, nstack, L)
    heat = heatmaps.astype(jnp.float32).reshape(B, L)

    kp_idx = keypoints[..., 0].astype(jnp.int32)              # (B, P, K) flat tag index
    vis = keypoints[..., -1] == 1                             # (B, P, K) visibility
    safe_idx = jnp.clip(jnp.where(vis, kp_idx, 0), 0, L - 1)  # OOB-safe (masked anyway)

    # Hoisted gather: tag values at keypoint indices, for every stack.
    idx_b = jnp.broadcast_to(safe_idx.reshape(B, 1, P * K), (B, nstack, P * K))
    gathered = jnp.take_along_axis(tags, idx_b, axis=2).reshape(B, nstack, P, K)

    # Pad P -> multiple of 8 (sublanes), K -> multiple of 128 (lanes); zeros are masked by vis.
    P_pad = _round_up(P, 8)
    K_pad = _round_up(K, 128)
    vals_p = jnp.pad(gathered, ((0, 0), (0, 0), (0, P_pad - P), (0, K_pad - K)))
    vis_p = jnp.pad(vis.astype(jnp.float32), ((0, 0), (0, P_pad - P), (0, K_pad - K)))

    # Pad L -> multiple of 1024 and reshape to a sublane/lane-dense (RL, 128) tile.
    L_pad = _round_up(L, 8 * 128)
    RL = L_pad // 128
    dets_p = jnp.pad(dets, ((0, 0), (0, 0), (0, L_pad - L))).reshape(B, nstack, RL, 128)
    heat_p = jnp.pad(heat, ((0, 0), (0, L_pad - L))).reshape(B, RL, 128)

    kernel = _make_kernel(P_pad, K_pad, RL)
    out = pl.pallas_call(
        kernel,
        out_shape=jax.ShapeDtypeStruct((B, nstack, 1, 128), jnp.float32),
        grid_spec=pltpu.PrefetchScalarGridSpec(
            num_scalar_prefetch=0,
            grid=(B, nstack),
            in_specs=[
                pl.BlockSpec((1, 1, RL, 128), lambda b, i: (b, i, 0, 0)),      # dets
                pl.BlockSpec((1, RL, 128), lambda b, i: (b, 0, 0)),            # heatmaps
                pl.BlockSpec((1, 1, P_pad, K_pad), lambda b, i: (b, i, 0, 0)), # gathered tags
                pl.BlockSpec((1, P_pad, K_pad), lambda b, i: (b, 0, 0)),       # visibility
            ],
            out_specs=pl.BlockSpec((1, 1, 1, 128), lambda b, i: (b, i, 0, 0)),
        ),
        compiler_params=pltpu.CompilerParams(
            dimension_semantics=("parallel", "parallel")),
    )(dets_p, heat_p, vals_p, vis_p)

    push = out[:, :, 0, 0]
    pull = out[:, :, 0, 1]
    det = out[:, :, 0, 2]
    return push, pull, det


def _reference(preds, keypoints, heatmaps, nstack, M):
    """Pure numpy transcription of the PyTorch forward (for verification)."""
    preds = np.asarray(preds, np.float32)
    keypoints = np.asarray(keypoints, np.int64)
    heat = np.asarray(heatmaps, np.float32)
    B = preds.shape[0]
    P = keypoints.shape[1]
    dets = preds[:, :, :M]
    tags = preds[:, :, M:2 * M]
    push = np.zeros((B, nstack), np.float32)
    pull = np.zeros((B, nstack), np.float32)
    det = np.zeros((B, nstack), np.float32)
    for i in range(nstack):
        tag = tags[:, i].reshape(B, -1, 1)
        for b in range(B):
            mean_tags = np.zeros((P,), np.float64)
            cur = 0
            o0, o1 = 0.0, 0.0
            for p in range(P):
                mask = keypoints[b, p, :, -1] == 1
                vk = keypoints[b, p, mask, 0]
                if len(vk) > 0:
                    vt = tag[b, vk, 0].astype(np.float64)
                    m = vt.mean()
                    mean_tags[p] = m
                    o1 += np.sum((vt - m) ** 2) / len(vk)
                    cur += 1
            if cur > 0:
                o1 /= cur
                for p1 in range(cur - 1):
                    for p2 in range(p1 + 1, cur):
                        o0 += np.exp(-((mean_tags[p1] - mean_tags[p2]) ** 2))
                if cur > 1:
                    o0 /= cur * (cur - 1) / 2
                o0 *= 0.5
            push[b, i] = o0
            pull[b, i] = o1
            det[b, i] = np.sum((dets[b, i] - heat[b]) ** 2)
    return push, pull, det


if __name__ == "__main__":
    config = {"nstack": 2, "max_num_light": 4}
    B, H, W = 2, 16, 16
    P, K = 3, 8                       # num_people, keypoints per person
    M = config["max_num_light"]
    nstack = config["nstack"]
    L = M * H * W

    key = jax.random.PRNGKey(0)
    k1, k2, k3, k4 = jax.random.split(key, 4)
    preds = jax.random.normal(k1, (B, nstack, 2 * M, H, W), dtype=jnp.float32)
    heatmaps = jax.random.normal(k2, (B, M, H, W), dtype=jnp.float32)
    kp_pos = jax.random.randint(k3, (B, P, K, 1), 0, L)
    kp_flag = jax.random.bernoulli(k4, 0.7, (B, P, K, 1)).astype(jnp.int32)
    keypoints = jnp.concatenate([kp_pos, kp_flag], axis=-1).astype(jnp.int32)  # (B,P,K,2)

    push, pull, det = calc_loss_forward(
        preds, keypoints, heatmaps, nstack=nstack, max_num_light=M)
    jax.block_until_ready((push, pull, det))

    assert push.shape == (B, nstack) and pull.shape == (B, nstack) and det.shape == (B, nstack)
    rp, rl, rd = _reference(preds, keypoints, heatmaps, nstack, M)
    np.testing.assert_allclose(np.asarray(push), rp, rtol=1e-3, atol=1e-4)
    np.testing.assert_allclose(np.asarray(pull), rl, rtol=1e-3, atol=1e-4)
    np.testing.assert_allclose(np.asarray(det), rd, rtol=1e-3, atol=1e-2)
    print("KERNEL_OK")
</pallas_src>

<mosaic_0001>
module attributes {stable_mosaic.version = 11 : i64} {
  func.func @kernel(%arg0: i32, %arg1: i32, %arg2: memref<1x1x8x128xf32, #tpu.memory_space<vmem>>, %arg3: memref<1x8x128xf32, #tpu.memory_space<vmem>>, %arg4: memref<1x1x8x128xf32, #tpu.memory_space<vmem>>, %arg5: memref<1x8x128xf32, #tpu.memory_space<vmem>>, %arg6: memref<1x1x1x128xf32, #tpu.memory_space<vmem>>) attributes {dimension_semantics = [#tpu.dimension_semantics<parallel>, #tpu.dimension_semantics<parallel>], iteration_bounds = array<i64: 2, 2>, scalar_prefetch = 0 : i64, scratch_operands = 0 : i64, tpu.core_type = #tpu.core_type<tc>, window_params = [{transform_indices = @transform_0, window_bounds = array<i64: 1, 1, 8, 128>}, {transform_indices = @transform_1, window_bounds = array<i64: 1, 8, 128>}, {transform_indices = @transform_2, window_bounds = array<i64: 1, 1, 8, 128>}, {transform_indices = @transform_3, window_bounds = array<i64: 1, 8, 128>}, {transform_indices = @transform_4, window_bounds = array<i64: 1, 1, 1, 128>}]} {
    %c0 = arith.constant 0 : index
    %c0_0 = arith.constant 0 : index
    %c0_1 = arith.constant 0 : index
    %c0_2 = arith.constant 0 : index
    %0 = vector.load %arg2[%c0, %c0_0, %c0_1, %c0_2] : memref<1x1x8x128xf32, #tpu.memory_space<vmem>>, vector<1x1x8x128xf32>
    %1 = vector.shape_cast %0 : vector<1x1x8x128xf32> to vector<8x128xf32>
    %c0_3 = arith.constant 0 : index
    %c0_4 = arith.constant 0 : index
    %c0_5 = arith.constant 0 : index
    %2 = vector.load %arg3[%c0_3, %c0_4, %c0_5] : memref<1x8x128xf32, #tpu.memory_space<vmem>>, vector<1x8x128xf32>
    %3 = vector.shape_cast %2 : vector<1x8x128xf32> to vector<8x128xf32>
    %4 = arith.subf %1, %3 : vector<8x128xf32>
    %5 = arith.mulf %4, %4 : vector<8x128xf32>
    %6 = vector.shape_cast %5 : vector<8x128xf32> to vector<1x8x128xf32>
    %cst = arith.constant dense<0.000000e+00> : vector<1xf32>
    %7 = vector.multi_reduction <add>, %6, %cst [1, 2] : vector<1x8x128xf32> to vector<1xf32>
    %8 = vector.shape_cast %7 : vector<1xf32> to vector<1x1x1xf32>
    %9 = vector.extract %8[0, 0, 0] : f32 from vector<1x1x1xf32>
    %c0_6 = arith.constant 0 : index
    %c0_7 = arith.constant 0 : index
    %c0_8 = arith.constant 0 : index
    %c0_9 = arith.constant 0 : index
    %10 = vector.load %arg4[%c0_6, %c0_7, %c0_8, %c0_9] : memref<1x1x8x128xf32, #tpu.memory_space<vmem>>, vector<1x1x8x128xf32>
    %11 = vector.shape_cast %10 : vector<1x1x8x128xf32> to vector<8x128xf32>
    %c0_10 = arith.constant 0 : index
    %c0_11 = arith.constant 0 : index
    %c0_12 = arith.constant 0 : index
    %12 = vector.load %arg5[%c0_10, %c0_11, %c0_12] : memref<1x8x128xf32, #tpu.memory_space<vmem>>, vector<1x8x128xf32>
    %13 = vector.shape_cast %12 : vector<1x8x128xf32> to vector<8x128xf32>
    %cst_13 = arith.constant dense<0.000000e+00> : vector<8xf32>
    %14 = vector.multi_reduction <add>, %13, %cst_13 [1] : vector<8x128xf32> to vector<8xf32>
    %15 = vector.shape_cast %14 : vector<8xf32> to vector<8x1xf32>
    %cst_14 = arith.constant 0.000000e+00 : f32
    %16 = vector.broadcast %cst_14 : f32 to vector<8x1xf32>
    %17 = arith.cmpf ogt, %15, %16 : vector<8x1xf32>
    %18 = arith.extui %17 : vector<8x1xi1> to vector<8x1xi32>
    %19 = arith.sitofp %18 : vector<8x1xi32> to vector<8x1xf32>
    %cst_15 = arith.constant 1.000000e+00 : f32
    %20 = vector.broadcast %cst_15 : f32 to vector<8x1xf32>
    %21 = arith.maximumf %15, %20 : vector<8x1xf32>
    %22 = arith.mulf %13, %11 : vector<8x128xf32>
    %cst_16 = arith.constant dense<0.000000e+00> : vector<8xf32>
    %23 = vector.multi_reduction <add>, %22, %cst_16 [1] : vector<8x128xf32> to vector<8xf32>
    %24 = vector.shape_cast %23 : vector<8xf32> to vector<8x1xf32>
    %25 = arith.divf %24, %21 : vector<8x1xf32>
    %26 = arith.mulf %25, %19 : vector<8x1xf32>
    %27 = vector.broadcast %26 : vector<8x1xf32> to vector<8x128xf32>
    %28 = arith.subf %11, %27 : vector<8x128xf32>
    %29 = arith.mulf %28, %28 : vector<8x128xf32>
    %30 = arith.mulf %13, %29 : vector<8x128xf32>
    %cst_17 = arith.constant dense<0.000000e+00> : vector<8xf32>
    %31 = vector.multi_reduction <add>, %30, %cst_17 [1] : vector<8x128xf32> to vector<8xf32>
    %32 = vector.shape_cast %31 : vector<8xf32> to vector<8x1xf32>
    %33 = arith.mulf %19, %32 : vector<8x1xf32>
    %34 = arith.divf %33, %21 : vector<8x1xf32>
    %35 = vector.shape_cast %19 : vector<8x1xf32> to vector<1x8x1xf32>
    %cst_18 = arith.constant dense<0.000000e+00> : vector<1xf32>
    %36 = vector.multi_reduction <add>, %35, %cst_18 [1, 2] : vector<1x8x1xf32> to vector<1xf32>
    %37 = vector.shape_cast %36 : vector<1xf32> to vector<1x1x1xf32>
    %38 = vector.extract %37[0, 0, 0] : f32 from vector<1x1x1xf32>
    %39 = vector.shape_cast %34 : vector<8x1xf32> to vector<1x8x1xf32>
    %cst_19 = arith.constant dense<0.000000e+00> : vector<1xf32>
    %40 = vector.multi_reduction <add>, %39, %cst_19 [1, 2] : vector<1x8x1xf32> to vector<1xf32>
    %41 = vector.shape_cast %40 : vector<1xf32> to vector<1x1x1xf32>
    %42 = vector.extract %41[0, 0, 0] : f32 from vector<1x1x1xf32>
    %cst_20 = arith.constant 1.000000e+00 : f32
    %43 = arith.maximumf %38, %cst_20 : f32
    %44 = arith.divf %42, %43 : f32
    %45 = tpu.iota {dimensions = array<i32: 0>} : vector<8x8xi32>
    %46 = tpu.iota {dimensions = array<i32: 1>} : vector<8x8xi32>
    %47 = arith.cmpi eq, %45, %46 : vector<8x8xi32>
    %cst_21 = arith.constant 0.000000e+00 : f32
    %48 = vector.shape_cast %26 : vector<8x1xf32> to vector<8x1xf32>
    %49 = vector.broadcast %48 : vector<8x1xf32> to vector<8x8xf32>
    %50 = vector.broadcast %cst_21 : f32 to vector<8x8xf32>
    %51 = arith.select %47, %49, %50 : vector<8x8xi1>, vector<8x8xf32>
    %cst_22 = arith.constant dense<0.000000e+00> : vector<8xf32>
    %52 = vector.multi_reduction <add>, %51, %cst_22 [0] : vector<8x8xf32> to vector<8xf32>
    %53 = vector.shape_cast %52 : vector<8xf32> to vector<1x8xf32>
    %54 = vector.broadcast %26 : vector<8x1xf32> to vector<8x8xf32>
    %55 = vector.broadcast %53 : vector<1x8xf32> to vector<8x8xf32>
    %56 = arith.subf %54, %55 : vector<8x8xf32>
    %57 = arith.cmpi slt, %45, %46 : vector<8x8xi32>
    %58 = arith.sitofp %46 : vector<8x8xi32> to vector<8x8xf32>
    %59 = vector.broadcast %38 : f32 to vector<8x8xf32>
    %60 = arith.cmpf olt, %58, %59 : vector<8x8xf32>
    %61 = arith.andi %57, %60 : vector<8x8xi1>
    %62 = arith.extui %61 : vector<8x8xi1> to vector<8x8xi32>
    %63 = arith.sitofp %62 : vector<8x8xi32> to vector<8x8xf32>
    %64 = arith.mulf %56, %56 : vector<8x8xf32>
    %cst_23 = arith.constant 0.000000e+00 : f32
    %65 = vector.broadcast %cst_23 : f32 to vector<8x8xf32>
    %66 = arith.subf %65, %64 : vector<8x8xf32>
    %67 = math.exp %66 : vector<8x8xf32>
    %68 = arith.mulf %63, %67 : vector<8x8xf32>
    %69 = vector.shape_cast %68 : vector<8x8xf32> to vector<1x8x8xf32>
    %cst_24 = arith.constant dense<0.000000e+00> : vector<1xf32>
    %70 = vector.multi_reduction <add>, %69, %cst_24 [1, 2] : vector<1x8x8xf32> to vector<1xf32>
    %71 = vector.shape_cast %70 : vector<1xf32> to vector<1x1x1xf32>
    %72 = vector.extract %71[0, 0, 0] : f32 from vector<1x1x1xf32>
    %cst_25 = arith.constant 1.000000e+00 : f32
    %73 = arith.subf %38, %cst_25 : f32
    %74 = arith.mulf %38, %73 : f32
    %cst_26 = arith.constant 5.000000e-01 : f32
    %75 = arith.mulf %74, %cst_26 : f32
    %cst_27 = arith.constant 1.000000e+00 : f32
    %76 = arith.cmpf ogt, %38, %cst_27 : f32
    %cst_28 = arith.constant 1.000000e+00 : f32
    %77 = arith.maximumf %75, %cst_28 : f32
    %78 = arith.divf %72, %77 : f32
    %79 = arith.select %76, %78, %72 : f32
    %cst_29 = arith.constant 5.000000e-01 : f32
    %80 = arith.mulf %79, %cst_29 : f32
    %81 = tpu.iota {dimensions = array<i32: 1>} : vector<1x128xi32>
    %c0_i32 = arith.constant 0 : i32
    %82 = vector.broadcast %c0_i32 : i32 to vector<1x128xi32>
    %83 = arith.cmpi eq, %81, %82 : vector<1x128xi32>
    %c1_i32 = arith.constant 1 : i32
    %84 = vector.broadcast %c1_i32 : i32 to vector<1x128xi32>
    %85 = arith.cmpi eq, %81, %84 : vector<1x128xi32>
    %c2_i32 = arith.constant 2 : i32
    %86 = vector.broadcast %c2_i32 : i32 to vector<1x128xi32>
    %87 = arith.cmpi eq, %81, %86 : vector<1x128xi32>
    %cst_30 = arith.constant 0.000000e+00 : f32
    %88 = vector.broadcast %9 : f32 to vector<1x128xf32>
    %89 = vector.broadcast %cst_30 : f32 to vector<1x128xf32>
    %90 = arith.select %87, %88, %89 : vector<1x128xi1>, vector<1x128xf32>
    %91 = vector.broadcast %44 : f32 to vector<1x128xf32>
    %92 = arith.select %85, %91, %90 : vector<1x128xi1>, vector<1x128xf32>
    %93 = vector.broadcast %80 : f32 to vector<1x128xf32>
    %94 = arith.select %83, %93, %92 : vector<1x128xi1>, vector<1x128xf32>
    %c0_31 = arith.constant 0 : index
    %c0_32 = arith.constant 0 : index
    %c0_33 = arith.constant 0 : index
    %c0_34 = arith.constant 0 : index
    %95 = vector.load %arg6[%c0_31, %c0_32, %c0_33, %c0_34] : memref<1x1x1x128xf32, #tpu.memory_space<vmem>>, vector<1x1x1x128xf32>
    %96 = vector.shape_cast %95 : vector<1x1x1x128xf32> to vector<1x128xf32>
    %97 = vector.shape_cast %94 : vector<1x128xf32> to vector<1x1x1x128xf32>
    tpu.vector_store %arg6[%c0_31, %c0_32, %c0_33, %c0_34], %97 {strides = array<i32>} : memref<1x1x1x128xf32, #tpu.memory_space<vmem>>, vector<1x1x1x128xf32>,
    return
  }
  func.func @transform_0(%arg0: i32, %arg1: i32) -> (i32, i32, i32, i32) {
    %c0_i32 = arith.constant 0 : i32
    %c0_i32_0 = arith.constant 0 : i32
    %c0_i32_1 = arith.constant 0 : i32
    return %arg0, %arg1, %c0_i32, %c0_i32_0 : i32, i32, i32, i32
  }
  func.func @transform_1(%arg0: i32, %arg1: i32) -> (i32, i32, i32) {
    %c0_i32 = arith.constant 0 : i32
    %c0_i32_0 = arith.constant 0 : i32
    %c0_i32_1 = arith.constant 0 : i32
    return %arg0, %c0_i32, %c0_i32_0 : i32, i32, i32
  }
  func.func @transform_2(%arg0: i32, %arg1: i32) -> (i32, i32, i32, i32) {
    %c0_i32 = arith.constant 0 : i32
    %c0_i32_0 = arith.constant 0 : i32
    %c0_i32_1 = arith.constant 0 : i32
    return %arg0, %arg1, %c0_i32, %c0_i32_0 : i32, i32, i32, i32
  }
  func.func @transform_3(%arg0: i32, %arg1: i32) -> (i32, i32, i32) {
    %c0_i32 = arith.constant 0 : i32
    %c0_i32_0 = arith.constant 0 : i32
    %c0_i32_1 = arith.constant 0 : i32
    return %arg0, %c0_i32, %c0_i32_0 : i32, i32, i32
  }
  func.func @transform_4(%arg0: i32, %arg1: i32) -> (i32, i32, i32, i32) {
    %c0_i32 = arith.constant 0 : i32
    %c0_i32_0 = arith.constant 0 : i32
    %c0_i32_1 = arith.constant 0 : i32
    return %arg0, %arg1, %c0_i32, %c0_i32_0 : i32, i32, i32, i32
  }
}

</mosaic_0001>

<llo_original>
// kernel: tpu_custom_call.1
$region0: #{tpu_custom_call.1}
  #allocation0 [shape = 'u32[]', space=smem, size = 0x4, offset = 0x4, fixed_abs, tag = 'smem constant byte address 0x4 - core index']
  #allocation1 [shape = 'u32[72,128]{1,0:T(1,128)}', space=vmem, size = 0x9000, scoped, tag = 'internal scratch']
  %s0 = inlined_call_operand.hbm [shape: f32[2,2,8,128], index: 0, kind: input, shape index: {}]
  %s1 = inlined_call_operand.hbm [shape: f32[2,8,128], index: 1, kind: input, shape index: {}]
  %s2 = inlined_call_operand.hbm [shape: f32[2,2,8,128], index: 2, kind: input, shape index: {}]
  %s3 = inlined_call_operand.hbm [shape: f32[2,8,128], index: 3, kind: input, shape index: {}]
  %s4 = inlined_call_operand.hbm [shape: f32[2,2,1,128], index: 4, kind: output, shape index: {}]
  %s5 = sld [smem:[#allocation0]]
  $region65: #{tpu_custom_call.1} parent=0
    _
  %s7 = ssub.s32 1, %s5
  %s8 = scalar_select 0, %s7, %s5
  $region1: #{tpu_custom_call.1} parent=0
    #allocation2 [shape = 'u8[8192]{0}', space=vmem, size = 0x2000, scoped, tag = 'input window, operand 0']
    #allocation3 [shape = 's32[2]{0}', space=sflag, size = 0x8, scoped, tag = 'scoped memory for tpu_custom_call.1']
    #allocation4 [shape = 's32[2]{0}', space=sflag, size = 0x8, scoped, tag = 'scoped memory for tpu_custom_call.1']
    #allocation5 [shape = 'u8[8192]{0}', space=vmem, size = 0x2000, scoped, tag = 'input window, operand 1']
    #allocation6 [shape = 's32[2]{0}', space=sflag, size = 0x8, scoped, tag = 'scoped memory for tpu_custom_call.1']
    #allocation7 [shape = 'u8[8192]{0}', space=vmem, size = 0x2000, scoped, tag = 'input window, operand 2']
    #allocation8 [shape = 'u8[8192]{0}', space=vmem, size = 0x2000, scoped, tag = 'input window, operand 3']
    #allocation9 [shape = 's32[2]{0}', space=sflag, size = 0x8, scoped, tag = 'scoped memory for tpu_custom_call.1']
    #allocation10 [shape = 'u8[1024]{0}', space=vmem, size = 0x400, scoped, tag = 'output window, operand 0']
    %9 = vsyncpa [#allocation3], 0
    %s10 = scalar_lea.sflag [#allocation3], 1
    %11 = vsyncpa %s10, 0
    %12 = vsyncpa [#allocation6], 0
    %s13 = scalar_lea.sflag [#allocation6], 1
    %14 = vsyncpa %s13, 0
    %15 = vsyncpa [#allocation9], 0
    %s16 = scalar_lea.sflag [#allocation9], 1
    %17 = vsyncpa %s16, 0
    %18 = vsyncpa [#allocation4], 0
    %s19 = scalar_lea.sflag [#allocation4], 1
    %20 = vsyncpa %s19, 0
    loop: start=0, step=1, limit=6
    $region2: #{tpu_custom_call.1} parent=1 // loop_pre_header
      _
    $region3: #{tpu_custom_call.1} parent=1 // loop_header
      %s22 = sphi 0, %s26
      %p23 = scmp.ge.s32.totalorder %s22, 6
      %s29 = sphi 0, %s41
      %s30 = sphi 0, %s37
      %s31 = sphi 0, %s29
      %s32 = sphi 0, %s30
      %s33 = sphi 0, %s31
      %s34 = sphi 0, %s32
      %s46 = sphi 0, %s48
      %s49 = sphi 0, %s46
      %s50 = sphi 0, %s49
      %s66 = sphi 0, %s50
      %s72 = sphi 0, %s74
      %s75 = sphi 0, %s72
      %s76 = sphi 0, %s75
      %s92 = sphi 0, %s76
      %s100 = sphi 0, %s102
      %s103 = sphi 0, %s100
      %s104 = sphi 0, %s103
      %s120 = sphi 0, %s104
      %s126 = sphi 0, %s128
      %s129 = sphi 0, %s126
      %s130 = sphi 0, %s129
      %s146 = sphi 0, %s130
      %s154 = sphi 0, %s156
      %s157 = sphi 0, %s154
      %s158 = sphi 0, %s157
      %s174 = sphi 0, %s158
    $region4: #{tpu_custom_call.1} parent=1 // loop_header_branch
      %25 = sbr.rel (%p23) target = $region8
    $region5: #{tpu_custom_call.1} parent=1 // loop_body
      %s27 = ssub.s32 %s22, 1
      %s28 = ssub.s32 %s22, 2
      %s35 = sadd.s32 1, %s30
      %p36 = scmp.ge.s32.totalorder %s35, 2
      %s37 = scalar_select %p36, 0, %s35
      %s38 = sadd.s32 1, %s29
      %s39 = scalar_select %p36, %s38, %s29
      %p40 = scmp.ge.s32.totalorder %s39, 2
      %s41 = scalar_select %p40, 0, %s39
      %s42 = ssub.s32 %s29, %s41
      %s43 = ssub.s32 %s30, %s37
      %s44 = sor.u32 %s42, %s43
      %p45 = scmp.eq.s32.totalorder %s44, 0
      %s47 = sadd.s32 %s46, 1
      %s48 = scalar_select %p45, %s46, %s47
      %p51 = pneg %p45
      %p52 = scmp.eq.s32.totalorder %s22, 3
      %p53 = por %p51, %p52
      %p54 = scmp.ne.s32.totalorder %s46, %s49
      %p55 = scmp.eq.s32.totalorder %s22, 0
      %p56 = por %p54, %p55
      %p57 = scmp.ne.s32.totalorder %s46, %s49
      %p58 = scmp.eq.s32.totalorder %s27, 3
      %p59 = por %p57, %p58
      %p60 = scmp.ne.s32.totalorder %s49, %s50
      %p61 = scmp.eq.s32.totalorder %s27, 0
      %p62 = por %p60, %p61
      %p63 = scmp.ne.s32.totalorder %s49, %s50
      %p64 = scmp.eq.s32.totalorder %s28, 3
      %p65 = por %p63, %p64
      %p67 = scmp.ne.s32.totalorder %s50, %s66
      %p68 = scmp.eq.s32.totalorder %s28, 0
      %p69 = por %p67, %p68
      %s70 = ssub.s32 %s29, %s41
      %p71 = scmp.eq.s32.totalorder %s70, 0
      %s73 = sadd.s32 %s72, 1
      %s74 = scalar_select %p71, %s72, %s73
      %p77 = pneg %p71
      %p78 = scmp.eq.s32.totalorder %s22, 3
      %p79 = por %p77, %p78
      %p80 = scmp.ne.s32.totalorder %s72, %s75
      %p81 = scmp.eq.s32.totalorder %s22, 0
      %p82 = por %p80, %p81
      %p83 = scmp.ne.s32.totalorder %s72, %s75
      %p84 = scmp.eq.s32.totalorder %s27, 3
      %p85 = por %p83, %p84
      %p86 = scmp.ne.s32.totalorder %s75, %s76
      %p87 = scmp.eq.s32.totalorder %s27, 0
      %p88 = por %p86, %p87
      %p89 = scmp.ne.s32.totalorder %s75, %s76
      %p90 = scmp.eq.s32.totalorder %s28, 3
      %p91 = por %p89, %p90
      %p93 = scmp.ne.s32.totalorder %s76, %s92
      %p94 = scmp.eq.s32.totalorder %s28, 0
      %p95 = por %p93, %p94
      %s96 = ssub.s32 %s29, %s41
      %s97 = ssub.s32 %s30, %s37
      %s98 = sor.u32 %s96, %s97
      %p99 = scmp.eq.s32.totalorder %s98, 0
      %s101 = sadd.s32 %s100, 1
      %s102 = scalar_select %p99, %s100, %s101
      %p105 = pneg %p99
      %p106 = scmp.eq.s32.totalorder %s22, 3
      %p107 = por %p105, %p106
      %p108 = scmp.ne.s32.totalorder %s100, %s103
      %p109 = scmp.eq.s32.totalorder %s22, 0
      %p110 = por %p108, %p109
      %p111 = scmp.ne.s32.totalorder %s100, %s103
      %p112 = scmp.eq.s32.totalorder %s27, 3
      %p113 = por %p111, %p112
      %p114 = scmp.ne.s32.totalorder %s103, %s104
      %p115 = scmp.eq.s32.totalorder %s27, 0
      %p116 = por %p114, %p115
      %p117 = scmp.ne.s32.totalorder %s103, %s104
      %p118 = scmp.eq.s32.totalorder %s28, 3
      %p119 = por %p117, %p118
      %p121 = scmp.ne.s32.totalorder %s104, %s120
      %p122 = scmp.eq.s32.totalorder %s28, 0
      %p123 = por %p121, %p122
      %s124 = ssub.s32 %s29, %s41
      %p125 = scmp.eq.s32.totalorder %s124, 0
      %s127 = sadd.s32 %s126, 1
      %s128 = scalar_select %p125, %s126, %s127
      %p131 = pneg %p125
      %p132 = scmp.eq.s32.totalorder %s22, 3
      %p133 = por %p131, %p132
      %p134 = scmp.ne.s32.totalorder %s126, %s129
      %p135 = scmp.eq.s32.totalorder %s22, 0
      %p136 = por %p134, %p135
      %p137 = scmp.ne.s32.totalorder %s126, %s129
      %p138 = scmp.eq.s32.totalorder %s27, 3
      %p139 = por %p137, %p138
      %p140 = scmp.ne.s32.totalorder %s129, %s130
      %p141 = scmp.eq.s32.totalorder %s27, 0
      %p142 = por %p140, %p141
      %p143 = scmp.ne.s32.totalorder %s129, %s130
      %p144 = scmp.eq.s32.totalorder %s28, 3
      %p145 = por %p143, %p144
      %p147 = scmp.ne.s32.totalorder %s130, %s146
      %p148 = scmp.eq.s32.totalorder %s28, 0
      %p149 = por %p147, %p148
      %s150 = ssub.s32 %s29, %s41
      %s151 = ssub.s32 %s30, %s37
      %s152 = sor.u32 %s150, %s151
      %p153 = scmp.eq.s32.totalorder %s152, 0
      %s155 = sadd.s32 %s154, 1
      %s156 = scalar_select %p153, %s154, %s155
      %p159 = pneg %p153
      %p160 = scmp.eq.s32.totalorder %s22, 3
      %p161 = por %p159, %p160
      %p162 = scmp.ne.s32.totalorder %s154, %s157
      %p163 = scmp.eq.s32.totalorder %s22, 0
      %p164 = por %p162, %p163
      %p165 = scmp.ne.s32.totalorder %s154, %s157
      %p166 = scmp.eq.s32.totalorder %s27, 3
      %p167 = por %p165, %p166
      %p168 = scmp.ne.s32.totalorder %s157, %s158
      %p169 = scmp.eq.s32.totalorder %s27, 0
      %p170 = por %p168, %p169
      %p171 = scmp.ne.s32.totalorder %s157, %s158
      %p172 = scmp.eq.s32.totalorder %s28, 3
      %p173 = por %p171, %p172
      %p175 = scmp.ne.s32.totalorder %s158, %s174
      %p176 = scmp.eq.s32.totalorder %s28, 0
      %p177 = por %p175, %p176
      %p178 = scmp.le.s32.totalorder 1, %s22
      %p179 = scmp.lt.s32.totalorder %s22, 5
      %p180 = pnand %p178, %p179
      %p181 = pneg %p180
      // Predicated region
      $region9: #{tpu_custom_call.1} parent=5 // pred_check
        _
      $region10: #{tpu_custom_call.1} parent=5 // pred_check_branch
        %183 = sbr.rel (%p180) target = $region12
      $region11: #{tpu_custom_call.1} parent=5 // pred_region
        %s184 = ssub.s32 %s22, 1
      $region12: #{tpu_custom_call.1} parent=5 // pred_fallthru
        _
      %p185 = scmp.lt.s32.totalorder %s22, 4
      // Predicated region
      $region13: #{tpu_custom_call.1} parent=5 // pred_check
        %p186 = pneg %p185
      $region14: #{tpu_custom_call.1} parent=5 // pred_check_branch
        %188 = sbr.rel (%p186) target = $region16
      $region15: #{tpu_custom_call.1} parent=5 // pred_region
        // Predicated region
        $region17: #{tpu_custom_call.1} parent=15 // pred_check
          %p189 = pneg %p56
        $region18: #{tpu_custom_call.1} parent=15 // pred_check_branch
          %191 = sbr.rel (%p189) target = $region20
        $region19: #{tpu_custom_call.1} parent=15 // pred_region
          %s192 = sand.u32 %s46, 1
          %s193 = scalar_lea.sflag [#allocation3], %s192
          %s194 = sand.u32 %s46, 1
          %s195 = smul.addr %s194, 8
          %s196 = scalar_lea.vmem [#allocation2], %s195
          %198 = vsyncadd %s193, 0
          %s199 = smul.addr %s29, 2
          %s200 = sadd.s32 %s30, %s199
          %s201 = smul.addr %s200, 8
          %s202 = scalar_lea.hbm %s0, %s201
          %s204 = sshll.u32 %s202, 4
          %s205 = int_to_ptr.hbm [resolvable:$true] %s204
          %s206 = sshll.u32 %s196, 4
          %s207 = int_to_ptr.vmem [resolvable:$true] %s206
          %209 = dma.hbm_to_vmem [thread:$0]  %s205, 128, %s207, %s193
        $region20: #{tpu_custom_call.1} parent=15 // pred_fallthru
          _
        // Predicated region
        $region21: #{tpu_custom_call.1} parent=15 // pred_check
          %p210 = pneg %p82
        $region22: #{tpu_custom_call.1} parent=15 // pred_check_branch
          %212 = sbr.rel (%p210) target = $region24
        $region23: #{tpu_custom_call.1} parent=15 // pred_region
          %s213 = sand.u32 %s22, 1
          %s214 = scalar_lea.sflag [#allocation6], %s213
          %s215 = sand.u32 %s72, 1
          %s216 = smul.addr %s215, 8
          %s217 = scalar_lea.vmem [#allocation5], %s216
          %219 = vsyncadd %s214, 0
          %s220 = smul.addr %s29, 8
          %s221 = scalar_lea.hbm %s1, %s220
          %s223 = sshll.u32 %s221, 4
          %s224 = int_to_ptr.hbm [resolvable:$true] %s223
          %s225 = sshll.u32 %s217, 4
          %s226 = int_to_ptr.vmem [resolvable:$true] %s225
          %228 = dma.hbm_to_vmem [thread:$0]  %s224, 128, %s226, %s214
        $region24: #{tpu_custom_call.1} parent=15 // pred_fallthru
          _
        // Predicated region
        $region25: #{tpu_custom_call.1} parent=15 // pred_check
          %p229 = pneg %p110
        $region26: #{tpu_custom_call.1} parent=15 // pred_check_branch
          %231 = sbr.rel (%p229) target = $region28
        $region27: #{tpu_custom_call.1} parent=15 // pred_region
          %s232 = sand.u32 %s22, 1
          %s233 = scalar_lea.sflag [#allocation6], %s232
          %s234 = sand.u32 %s100, 1
          %s235 = smul.addr %s234, 8
          %s236 = scalar_lea.vmem [#allocation7], %s235
          %238 = vsyncadd %s233, 0
          %s239 = smul.addr %s29, 2
          %s240 = sadd.s32 %s30, %s239
          %s241 = smul.addr %s240, 8
          %s242 = scalar_lea.hbm %s2, %s241
          %s244 = sshll.u32 %s242, 4
          %s245 = int_to_ptr.hbm [resolvable:$true] %s244
          %s246 = sshll.u32 %s236, 4
          %s247 = int_to_ptr.vmem [resolvable:$true] %s246
          %249 = dma.hbm_to_vmem [thread:$0]  %s245, 128, %s247, %s233
        $region28: #{tpu_custom_call.1} parent=15 // pred_fallthru
          _
        // Predicated region
        $region29: #{tpu_custom_call.1} parent=15 // pred_check
          %p250 = pneg %p136
        $region30: #{tpu_custom_call.1} parent=15 // pred_check_branch
          %252 = sbr.rel (%p250) target = $region32
        $region31: #{tpu_custom_call.1} parent=15 // pred_region
          %s253 = sand.u32 %s126, 1
          %s254 = scalar_lea.sflag [#allocation9], %s253
          %s255 = sand.u32 %s126, 1
          %s256 = smul.addr %s255, 8
          %s257 = scalar_lea.vmem [#allocation8], %s256
          %259 = vsyncadd %s254, 0
          %s260 = smul.addr %s29, 8
          %s261 = scalar_lea.hbm %s3, %s260
          %s263 = sshll.u32 %s261, 4
          %s264 = int_to_ptr.hbm [resolvable:$true] %s263
          %s265 = sshll.u32 %s257, 4
          %s266 = int_to_ptr.vmem [resolvable:$true] %s265
          %268 = dma.hbm_to_vmem [thread:$0]  %s264, 128, %s266, %s254
        $region32: #{tpu_custom_call.1} parent=15 // pred_fallthru
          _
      $region16: #{tpu_custom_call.1} parent=5 // pred_fallthru
        _
      %p269 = scmp.le.s32.totalorder 1, %s22
      %p270 = scmp.lt.s32.totalorder %s22, 5
      %p271 = pnand %p269, %p270
      %p272 = pneg %p271
      // Predicated region
      $region33: #{tpu_custom_call.1} parent=5 // pred_check
        _
      $region34: #{tpu_custom_call.1} parent=5 // pred_check_branch
        %274 = sbr.rel (%p271) target = $region36
      $region35: #{tpu_custom_call.1} parent=5 // pred_region
        %s275 = ssub.s32 %s22, 1
        %s276 = sand.u32 %s49, 1
        %s277 = scalar_lea.sflag [#allocation3], %s276
        %s278 = sand.u32 %s49, 1
        %s279 = smul.addr %s278, 8
        %s280 = scalar_lea.vmem [#allocation2], %s279
        // Predicated region
        $region37: #{tpu_custom_call.1} parent=35 // pred_check
          %p281 = pneg %p62
        $region38: #{tpu_custom_call.1} parent=35 // pred_check_branch
          %283 = sbr.rel (%p281) target = $region40
        $region39: #{tpu_custom_call.1} parent=35 // pred_region
          %285 = dma.done %s277, 128
        $region40: #{tpu_custom_call.1} parent=35 // pred_fallthru
          _
        %s286 = sand.u32 %s27, 1
        %s287 = scalar_lea.sflag [#allocation6], %s286
        %s288 = sand.u32 %s75, 1
        %s289 = smul.addr %s288, 8
        %s290 = scalar_lea.vmem [#allocation5], %s289
        // Predicated region
        $region41: #{tpu_custom_call.1} parent=35 // pred_check
          %p291 = pneg %p88
        $region42: #{tpu_custom_call.1} parent=35 // pred_check_branch
          %293 = sbr.rel (%p291) target = $region44
        $region43: #{tpu_custom_call.1} parent=35 // pred_region
          %295 = dma.done %s287, 128
        $region44: #{tpu_custom_call.1} parent=35 // pred_fallthru
          _
        %s296 = sand.u32 %s27, 1
        %s297 = scalar_lea.sflag [#allocation6], %s296
        %s298 = sand.u32 %s103, 1
        %s299 = smul.addr %s298, 8
        %s300 = scalar_lea.vmem [#allocation7], %s299
        // Predicated region
        $region45: #{tpu_custom_call.1} parent=35 // pred_check
          %p301 = pneg %p116
        $region46: #{tpu_custom_call.1} parent=35 // pred_check_branch
          %303 = sbr.rel (%p301) target = $region48
        $region47: #{tpu_custom_call.1} parent=35 // pred_region
          %305 = dma.done %s297, 128
        $region48: #{tpu_custom_call.1} parent=35 // pred_fallthru
          _
        %s306 = sand.u32 %s129, 1
        %s307 = scalar_lea.sflag [#allocation9], %s306
        %s308 = sand.u32 %s129, 1
        %s309 = smul.addr %s308, 8
        %s310 = scalar_lea.vmem [#allocation8], %s309
        // Predicated region
        $region49: #{tpu_custom_call.1} parent=35 // pred_check
          %p311 = pneg %p142
        $region50: #{tpu_custom_call.1} parent=35 // pred_check_branch
          %313 = sbr.rel (%p311) target = $region52
        $region51: #{tpu_custom_call.1} parent=35 // pred_region
          %315 = dma.done %s307, 128
        $region52: #{tpu_custom_call.1} parent=35 // pred_fallthru
          _
        %s316 = sand.u32 %s49, 1
        %s317 = scalar_lea.sflag [#allocation3], %s316
        %s318 = sand.u32 %s49, 1
        %s319 = smul.addr %s318, 8
        %s320 = scalar_lea.vmem [#allocation2], %s319
        %p321 = pneg %p62
        %p322 = pneg %p59
        %s323 = sand.u32 %s27, 1
        %s324 = scalar_lea.sflag [#allocation6], %s323
        %s325 = sand.u32 %s75, 1
        %s326 = smul.addr %s325, 8
        %s327 = scalar_lea.vmem [#allocation5], %s326
        %p328 = pneg %p88
        %p329 = pneg %p85
        %s330 = sand.u32 %s27, 1
        %s331 = scalar_lea.sflag [#allocation6], %s330
        %s332 = sand.u32 %s103, 1
        %s333 = smul.addr %s332, 8
        %s334 = scalar_lea.vmem [#allocation7], %s333
        %p335 = pneg %p116
        %p336 = pneg %p113
        %s337 = sand.u32 %s129, 1
        %s338 = scalar_lea.sflag [#allocation9], %s337
        %s339 = sand.u32 %s129, 1
        %s340 = smul.addr %s339, 8
        %s341 = scalar_lea.vmem [#allocation8], %s340
        %p342 = pneg %p142
        %p343 = pneg %p139
        %p344 = pneg %p170
        %p345 = pneg %p167
        %s346 = sand.u32 %s157, 1
        %s347 = scalar_lea.sflag [#allocation4], %s346
        %s348 = sand.u32 %s157, 1
        %s349 = scalar_lea.vmem [#allocation10], %s348
        %v350 = vld [vmem:[%s280] sm:$0xff]
        %v351 = vld [vmem:[%s290] sm:$0xff]
        %v352 = vsub.f32 %v350, %v351
        %v353 = vmul.f32 %v352, %v352
        %354 = vadd.xlane.f32.xlu0 %v353
        %v355 = vpop.xlane.xlu0 %354
        %v356 = vrot.slane %v355, 4
        %v357 = vadd.f32 %v355, %v356
        %v358 = vrot.slane %v357, 2
        %v359 = vadd.f32 %v357, %v358
        %v360 = vrot.slane %v359, 1
        %v361 = vadd.f32 %v359, %v360
        %s362 = vtos %v361
        %v363 = vld [vmem:[%s300] sm:$0xff]
        %v364 = vld [vmem:[%s310] sm:$0xff]
        %365 = vadd.xlane.f32.xlu0 %v364
        %v366 = vpop.xlane.xlu0 %365
        %vm367 = vcmp.gt.f32.partialorder %v366, 0.0
        %v368 = vsel %vm367, 1, 0
        %v369 = vcvt.s32.f32 %v368
        %v370 = vmax.f32 %v366, 1.0
        %v371 = vmul.f32 %v364, %v363
        %372 = vadd.xlane.f32.xlu0 %v371
        %v373 = vpop.xlane.xlu0 %372
        %v374 = vrcp.pop %v370
        %v375 = vmul.f32 %v370, %v374
        %v376 = vsub.f32 1.0, %v375
        %v377 = vmul.f32 %v374, %v376
        %v378 = vadd.f32 %v374, %v377
        %vm379 = vweird.f32 %v370
        %vm380 = vweird.f32 %v374
        %vm381 = vmor %vm379, %vm380
        %v382 = vsel %vm381, %v374, %v378
        %v383 = vand.u32 2147483647, %v370
        %vm384 = vcmp.eq.f32.partialorder %v383, 8.507059e+37
        %v385 = vand.u32 %v370, 2147483648
        %v386 = vor.u32 1.1754944e-38, %v385
        %v387 = vsel %vm384, %v386, %v382
        %v388 = vmul.f32 %v373, %v387
        %v389 = vmul.f32 %v388, %v369
        %v390 = vsub.f32 %v363, %v389
        %v391 = vmul.f32 %v390, %v390
        %v392 = vmul.f32 %v364, %v391
        %393 = vadd.xlane.f32.xlu0 %v392
        %v394 = vpop.xlane.xlu0 %393
        %v395 = vmul.f32 %v369, %v394
        %v396 = vmul.f32 %v395, %v387
        %vm397 = vcmask 7168
        %v398 = vsel %vm397, %v369, 0.0
        %399 = vadd.xlane.f32.xlu0 %v398
        %v400 = vpop.xlane.xlu0 %399
        %v401 = vrot.slane %v400, 4
        %v402 = vadd.f32 %v400, %v401
        %v403 = vrot.slane %v402, 2
        %v404 = vadd.f32 %v402, %v403
        %v405 = vrot.slane %v404, 1
        %v406 = vadd.f32 %v404, %v405
        %s407 = vtos %v406
        %v408 = vsel %vm397, %v396, 0.0
        %409 = vadd.xlane.f32.xlu0 %v408
        %v410 = vpop.xlane.xlu0 %409
        %v411 = vrot.slane %v410, 4
        %v412 = vadd.f32 %v410, %v411
        %v413 = vrot.slane %v412, 2
        %v414 = vadd.f32 %v412, %v413
        %v415 = vrot.slane %v414, 1
        %v416 = vadd.f32 %v414, %v415
        %s417 = vtos %v416
        %s418 = smax.f32 %s407, 1.0
        %v419 = vstv %s418
        %v420 = vrcp.pop %v419
        %v421 = vmul.f32 %v419, %v420
        %v422 = vsub.f32 1.0, %v421
        %v423 = vmul.f32 %v420, %v422
        %v424 = vadd.f32 %v420, %v423
        %vm425 = vweird.f32 %v419
        %vm426 = vweird.f32 %v420
        %vm427 = vmor %vm425, %vm426
        %v428 = vsel %vm427, %v420, %v424
        %v429 = vand.u32 2147483647, %v419
        %vm430 = vcmp.eq.f32.partialorder %v429, 8.507059e+37
        %v431 = vand.u32 %v419, 2147483648
        %v432 = vor.u32 1.1754944e-38, %v431
        %v433 = vsel %vm430, %v432, %v428
        %s434 = vtos %v433
        %s435 = smul.f32 %s417, %s434
        %v436 = vlaneseq
        %v437 = vshrl.u32 %v436, 7
        %v438 = vlaneseq
        %v439 = vand.u32 %v438, 127
        %vm440 = vcmp.eq.s32.totalorder %v437, %v439
        %v441 = vsel %vm440, %v389, 0.0
        %vm442 = vcmask 64512
        %v443 = vsel %vm442, %v441, 0.0
        %v444 = vrot.slane %v443, 4
        %v445 = vadd.f32 %v443, %v444
        %v446 = vrot.slane %v445, 2
        %v447 = vadd.f32 %v445, %v446
        %v448 = vrot.slane %v447, 1
        %v449 = vadd.f32 %v447, %v448
        %v450 = vsub.f32 %v389, %v449
        %vm451 = vcmp.lt.s32.totalorder %v437, %v439
        %v452 = vcvt.s32.f32 %v439
        %v453 = vstv %s407
        %vm454 = vcmp.lt.f32.partialorder %v452, %v453
        %vm455 = vmand %vm451, %vm454
        %v456 = vsel %vm455, 1, 0
        %v457 = vcvt.s32.f32 %v456
        %v458 = vmul.f32 %v450, %v450
        %v459 = vsub.f32 0.0, %v458
        %v460 = vmul.f32 %v459, 1.442695
        %v461 = vpow.pop %v460
        %v462 = vmul.f32 %v457, %v461
        %v463 = vsel %vm442, %v462, 0.0
        %464 = vadd.xlane.f32.xlu0 %v463
        %v465 = vpop.xlane.xlu0 %464
        %v466 = vrot.slane %v465, 4
        %v467 = vadd.f32 %v465, %v466
        %v468 = vrot.slane %v467, 2
        %v469 = vadd.f32 %v467, %v468
        %v470 = vrot.slane %v469, 1
        %v471 = vadd.f32 %v469, %v470
        %s472 = vtos %v471
        %s473 = ssub.f32 %s407, 1.0
        %s474 = smul.f32 %s407, %s473
        %s475 = smul.f32 %s474, 0.5
        %p476 = scmp.gt.f32.partialorder %s407, 1.0
        %s477 = smax.f32 %s475, 1.0
        %v478 = vstv %s477
        %v479 = vrcp.pop %v478
        %v480 = vmul.f32 %v478, %v479
        %v481 = vsub.f32 1.0, %v480
        %v482 = vmul.f32 %v479, %v481
        %v483 = vadd.f32 %v479, %v482
        %vm484 = vweird.f32 %v478
        %vm485 = vweird.f32 %v479
        %vm486 = vmor %vm484, %vm485
        %v487 = vsel %vm486, %v479, %v483
        %v488 = vand.u32 2147483647, %v478
        %vm489 = vcmp.eq.f32.partialorder %v488, 8.507059e+37
        %v490 = vand.u32 %v478, 2147483648
        %v491 = vor.u32 1.1754944e-38, %v490
        %v492 = vsel %vm489, %v491, %v487
        %s493 = vtos %v492
        %s494 = smul.f32 %s472, %s493
        %s495 = scalar_select %p476, %s494, %s472
        %s496 = smul.f32 %s495, 0.5
        %vm497 = vcmp.eq.s32.totalorder %v439, 0
        %vm498 = vcmp.eq.s32.totalorder %v439, 1
        %vm499 = vcmp.eq.s32.totalorder %v439, 2
        %v500 = vstv %s362
        %v501 = vsel %vm499, %v500, 0.0
        %v502 = vstv %s435
        %v503 = vsel %vm498, %v502, %v501
        %v504 = vstv %s496
        %v505 = vsel %vm497, %v504, %v503
        %506 = vst [vmem:[%s349] sm:$0x1] %v505
        %s507 = sand.u32 %s157, 1
        %s508 = scalar_lea.sflag [#allocation4], %s507
        %s509 = sand.u32 %s157, 1
        %s510 = scalar_lea.vmem [#allocation10], %s509
        // Predicated region
        $region53: #{tpu_custom_call.1} parent=35 // pred_check
          %p511 = pneg %p167
        $region54: #{tpu_custom_call.1} parent=35 // pred_check_branch
          %513 = sbr.rel (%p511) target = $region56
        $region55: #{tpu_custom_call.1} parent=35 // pred_region
          %515 = vsyncadd %s508, 0
          %s516 = smul.addr %s31, 2
          %s517 = sadd.s32 %s32, %s516
          %s518 = scalar_lea.hbm %s4, %s517
          %s520 = sshll.u32 %s510, 4
          %s521 = int_to_ptr.vmem [resolvable:$true] %s520
          %s522 = sshll.u32 %s518, 4
          %s523 = int_to_ptr.hbm [resolvable:$true] %s522
          %525 = dma.vmem_to_hbm [thread:$0]  %s521, 16, %s523, %s508
        $region56: #{tpu_custom_call.1} parent=35 // pred_fallthru
          _
      $region36: #{tpu_custom_call.1} parent=5 // pred_fallthru
        _
      %p526 = scmp.le.s32.totalorder 2, %s22
      // Predicated region
      $region57: #{tpu_custom_call.1} parent=5 // pred_check
        %p527 = pneg %p526
      $region58: #{tpu_custom_call.1} parent=5 // pred_check_branch
        %529 = sbr.rel (%p527) target = $region60
      $region59: #{tpu_custom_call.1} parent=5 // pred_region
        %s530 = ssub.s32 %s22, 2
        // Predicated region
        $region61: #{tpu_custom_call.1} parent=59 // pred_check
          %p531 = pneg %p173
        $region62: #{tpu_custom_call.1} parent=59 // pred_check_branch
          %533 = sbr.rel (%p531) target = $region64
        $region63: #{tpu_custom_call.1} parent=59 // pred_region
          %s534 = sand.u32 %s158, 1
          %s535 = scalar_lea.sflag [#allocation4], %s534
          %s536 = sand.u32 %s158, 1
          %s537 = scalar_lea.vmem [#allocation10], %s536
          %539 = dma.done %s535, 16
        $region64: #{tpu_custom_call.1} parent=59 // pred_fallthru
          _
      $region60: #{tpu_custom_call.1} parent=5 // pred_fallthru
        _
    $region6: #{tpu_custom_call.1} parent=1 // loop_footer
      %s26 = sadd.s32 1, %s22
    $region7: #{tpu_custom_call.1} parent=1 // loop_footer_branch
      %21 = sbr.rel target = $region3
    $region8: #{tpu_custom_call.1} parent=1 // loop_exit
      _
    %540 = vsyncpa [#allocation3], 1
    %s541 = scalar_lea.sflag [#allocation3], 1
    %542 = vsyncpa %s541, 1
    %543 = vsyncpa [#allocation6], 1
    %s544 = scalar_lea.sflag [#allocation6], 1
    %545 = vsyncpa %s544, 1
    %546 = vsyncpa [#allocation9], 1
    %s547 = scalar_lea.sflag [#allocation9], 1
    %548 = vsyncpa %s547, 1
    %549 = vsyncpa [#allocation4], 1
    %s550 = scalar_lea.sflag [#allocation4], 1
    %551 = vsyncpa %s550, 1

</llo_original>
